<compile_context>
chip_gen: v5e
topology: v5e:2x2
jax: 0.10.0
libtpu: 0.0.40
codegen_flags: <defaults>
</compile_context>

<pallas_src>
import functools
import numpy as np
import jax
import jax.numpy as jnp
from jax.experimental import pallas as pl
from jax.experimental.pallas import tpu as pltpu

BF = jnp.bfloat16
F32 = jnp.float32
PAD_GRANULE = 128

# ------------------------------------------------------------------ chip detection
try:
    _KIND = jax.devices()[0].device_kind.lower()
except Exception:
    _KIND = ""
_IS_V7X = "7" in _KIND                    # 2 TensorCores / 64 MiB VMEM per core
_IS_V5 = "v5" in _KIND                    # no bf16 VPU -> keep elementwise math in f32
_SMALL_VMEM = _IS_V7X or (_KIND == "")    # be conservative when the chip is unknown
_VMEM_BIG = (30 if _SMALL_VMEM else 64) * 1024 * 1024
_ELEM_DTYPE = F32 if _IS_V5 else BF


# ----------------------------------------------------------------------------- utils
def _round_up(n, m):
    return ((n + m - 1) // m) * m


def _segments(offsets):
    return [(0 if i == 0 else offsets[i - 1], offsets[i]) for i in range(len(offsets))]


def _pad_rows(a, npad):
    return jnp.pad(a, ((0, npad - a.shape[0]),) + ((0, 0),) * (a.ndim - 1))


def _row_cap(*dims):
    m = max(dims)
    if m <= 64:
        return 512
    if m <= 256:
        return 256
    return 128


def _tile_rows(npad, cap):
    """Largest row tile (multiple of 8) <= cap dividing npad; on v7x split a grid of 1."""
    tm = min(cap, npad)
    while npad % tm:
        tm -= 8
    if _IS_V7X and npad // tm == 1 and tm % 16 == 0 and tm > 16:
        tm //= 2          # give both v7x TensorCores a grid step
    return tm


def _cparams(vmem=None):
    return pltpu.CompilerParams(dimension_semantics=("parallel",),
                                vmem_limit_bytes=vmem)


# ============================================================================= kernels
def _linear_kernel(x_ref, w_ref, s_ref, t_ref, o_ref, *, relu):
    """y = [relu]( (x @ w) * scale + shift )  -- fused Linear+BN(+ReLU)."""
    y = jnp.dot(x_ref[...], w_ref[...], preferred_element_type=F32)
    y = y * s_ref[...] + t_ref[...]
    if relu:
        y = jnp.maximum(y, 0.0)
    o_ref[...] = y.astype(o_ref.dtype)


def pallas_linear(x, w, s, t, relu=False, out_dtype=BF):
    npad, cin = x.shape
    cout = w.shape[1]
    tm = _tile_rows(npad, _row_cap(cin, cout))
    return pl.pallas_call(
        functools.partial(_linear_kernel, relu=relu),
        out_shape=jax.ShapeDtypeStruct((npad, cout), out_dtype),
        grid=(npad // tm,),
        in_specs=[pl.BlockSpec((tm, cin), lambda i: (i, 0)),
                  pl.BlockSpec((cin, cout), lambda i: (0, 0)),
                  pl.BlockSpec((1, cout), lambda i: (0, 0)),
                  pl.BlockSpec((1, cout), lambda i: (0, 0))],
        out_specs=pl.BlockSpec((tm, cout), lambda i: (i, 0)),
        compiler_params=_cparams(),
    )(x, w, s, t)


def _l1_qkv_kernel(x_ref, w1_ref, s1_ref, t1_ref, wqkv_ref, bqkv_ref, o_ref):
    """Bottleneck linear1+bn1+relu chained into one wide fused Q|K|V projection.
       Single lane-dense (tm, 3C) output (no in-kernel lane slicing)."""
    h = jnp.dot(x_ref[...], w1_ref[...], preferred_element_type=F32)
    h = jnp.maximum(h * s1_ref[...] + t1_ref[...], 0.0).astype(BF)
    qkv = jnp.dot(h, wqkv_ref[...], preferred_element_type=F32) + bqkv_ref[...]
    o_ref[...] = qkv.astype(o_ref.dtype)


def pallas_l1_qkv(x, w1, s1, t1, wqkv, bqkv):
    npad, c = x.shape
    tm = _tile_rows(npad, _row_cap(c))
    return pl.pallas_call(
        _l1_qkv_kernel,
        out_shape=jax.ShapeDtypeStruct((npad, 3 * c), BF),
        grid=(npad // tm,),
        in_specs=[pl.BlockSpec((tm, c), lambda i: (i, 0)),
                  pl.BlockSpec((c, c), lambda i: (0, 0)),
                  pl.BlockSpec((1, c), lambda i: (0, 0)),
                  pl.BlockSpec((1, c), lambda i: (0, 0)),
                  pl.BlockSpec((c, 3 * c), lambda i: (0, 0)),
                  pl.BlockSpec((1, 3 * c), lambda i: (0, 0))],
        out_specs=pl.BlockSpec((tm, 3 * c), lambda i: (i, 0)),
        compiler_params=_cparams(vmem=_VMEM_BIG),
    )(x, w1, s1, t1, wqkv, bqkv)


def _group_linear_pool_kernel(rel_ref, g_ref, wr_ref, wf_ref, s_ref, t_ref, o_ref):
    """TransitionDown hot path: max over neighbours of relu(bn(linear([rel|feat]))).
       rel and features are separate inputs (weight split) -> no HBM concat."""
    tm, ns, cin = g_ref.shape
    rel = rel_ref[...].reshape(tm * ns, 8).astype(BF)
    f = g_ref[...].reshape(tm * ns, cin)
    h = jnp.dot(rel, wr_ref[...], preferred_element_type=F32)
    h = h + jnp.dot(f, wf_ref[...], preferred_element_type=F32)
    h = jnp.maximum(h * s_ref[...] + t_ref[...], 0.0)
    o_ref[...] = jnp.max(h.reshape(tm, ns, -1), axis=1).astype(o_ref.dtype)


def pallas_group_linear_pool(rel8, g, wr, wf, s, t):
    npad, ns, cin = g.shape
    cout = wf.shape[1]
    tm = _tile_rows(npad, 256 if cout <= 128 else 128)
    return pl.pallas_call(
        _group_linear_pool_kernel,
        out_shape=jax.ShapeDtypeStruct((npad, cout), BF),
        grid=(npad // tm,),
        in_specs=[pl.BlockSpec((tm, ns, 8), lambda i: (i, 0, 0)),
                  pl.BlockSpec((tm, ns, cin), lambda i: (i, 0, 0)),
                  pl.BlockSpec((8, cout), lambda i: (0, 0)),
                  pl.BlockSpec((cin, cout), lambda i: (0, 0)),
                  pl.BlockSpec((1, cout), lambda i: (0, 0)),
                  pl.BlockSpec((1, cout), lambda i: (0, 0))],
        out_specs=pl.BlockSpec((tm, cout), lambda i: (i, 0)),
        compiler_params=_cparams(vmem=_VMEM_BIG),
    )(rel8, g, wr, wf, s, t)


def _attn_block_kernel(xq_ref, gk_ref, gv_ref, rel_ref, res_ref, aff_ref,
                       wp1_ref, wp2_ref, ww1_ref, bw1_ref, ww2_ref, bw2_ref, w3_ref,
                       o_ref, *, share, cd):
    """PointTransformerLayer vector attention + fused Bottleneck epilogue
       (bn2+ReLU -> linear3 -> bn3 -> +residual -> ReLU).
       aff rows: 0 sa, 1 ta (BN of linear_w), 2 s2, 3 t2 (bn2), 4 s3, 5 t3 (bn3)."""
    tn, ns, c = gk_ref.shape
    cs = c // share
    aff = aff_ref[...]
    sa = aff[0:1, :].reshape(1, 1, c).astype(cd)
    ta = aff[1:2, :].reshape(1, 1, c).astype(cd)
    s2 = aff[2:3, :]
    t2 = aff[3:4, :]
    s3 = aff[4:5, :]
    t3 = aff[5:6, :]

    # ---- linear_p as two MXU matmuls: the constant-1 channel of rel carries biases ----
    rel = rel_ref[...].reshape(tn * ns, 8).astype(BF)
    h = jnp.maximum(jnp.dot(rel, wp1_ref[...], preferred_element_type=F32), 0.0)
    p_r = jnp.dot(h.astype(BF), wp2_ref[...], preferred_element_type=F32)
    p_r = p_r.astype(cd).reshape(tn, ns, c)

    # ---- r = relu(bn(x_k - x_q + p_r))  (bf16 elementwise on v6e/v7x) ----
    xq = xq_ref[...].astype(cd)
    r = gk_ref[...].astype(cd) - xq[:, None, :] + p_r
    r = jnp.maximum(r * sa + ta, 0.0)

    # ---- linear_w MLP -> attention logits (tn, ns, cs) ----
    w = jnp.dot(r.reshape(tn * ns, c).astype(BF), ww1_ref[...],
                preferred_element_type=F32) + bw1_ref[...]
    w = jnp.maximum(w, 0.0).astype(BF)
    w = jnp.dot(w, ww2_ref[...], preferred_element_type=F32) + bw2_ref[...]
    w = w.reshape(tn, ns, cs)

    # ---- softmax over the neighbour axis (f32) ----
    w = jnp.exp(w - jnp.max(w, axis=1, keepdims=True))
    w = (w * pl.reciprocal(jnp.sum(w, axis=1, keepdims=True), approx=True)).astype(cd)

    # ---- share-planes grouped aggregation (mul in cd, reduction in f32) ----
    v = gv_ref[...].astype(cd) + p_r                       # (tn, ns, c)
    w_rep = jnp.concatenate([w] * share, axis=-1)          # (tn, ns, c), channel k -> w[k % cs]
    y = jnp.sum((v * w_rep).astype(F32), axis=1)           # (tn, c)

    # ---- bn2 + ReLU, then linear3 + bn3 + residual + ReLU ----
    y = jnp.maximum(y * s2 + t2, 0.0)
    z = jnp.dot(y.astype(BF), w3_ref[...], preferred_element_type=F32)
    z = z * s3 + t3 + res_ref[...].astype(F32)
    o_ref[...] = jnp.maximum(z, 0.0).astype(o_ref.dtype)


def pallas_attention_block(xq, gk, gv, rel8, identity, tw, share):
    npad, ns, c = gk.shape
    cs = c // share
    cap = 64 if (c >= 512 and _SMALL_VMEM) else 128
    tn = _tile_rows(npad, cap)
    const = lambda i: (0, 0)
    return pl.pallas_call(
        functools.partial(_attn_block_kernel, share=share, cd=_ELEM_DTYPE),
        out_shape=jax.ShapeDtypeStruct((npad, c), BF),
        grid=(npad // tn,),
        in_specs=[
            pl.BlockSpec((tn, c), lambda i: (i, 0)),
            pl.BlockSpec((tn, ns, c), lambda i: (i, 0, 0)),
            pl.BlockSpec((tn, ns, c), lambda i: (i, 0, 0)),
            pl.BlockSpec((tn, ns, 8), lambda i: (i, 0, 0)),
            pl.BlockSpec((tn, c), lambda i: (i, 0)),
            pl.BlockSpec((8, c), const),
            pl.BlockSpec((8, 128), const),
            pl.BlockSpec((128, c), const),
            pl.BlockSpec((c, cs), const), pl.BlockSpec((1, cs), const),
            pl.BlockSpec((cs, cs), const), pl.BlockSpec((1, cs), const),
            pl.BlockSpec((c, c), const),
        ],
        out_specs=pl.BlockSpec((tn, c), lambda i: (i, 0)),
        compiler_params=_cparams(vmem=_VMEM_BIG),
    )(xq, gk, gv, rel8, identity,
      tw["aff"], tw["wp1"], tw["wp2"], tw["ww1"], tw["bw1"], tw["ww2"], tw["bw2"], tw["w3"])


def _cls_kernel(x_ref, w1_ref, s1_ref, t1_ref, w2_ref, b2_ref, o_ref):
    """Fused classification head: Linear+BN+ReLU then the class-1 column of Linear(32,2)."""
    h = jnp.dot(x_ref[...], w1_ref[...], preferred_element_type=F32)
    h = jnp.maximum(h * s1_ref[...] + t1_ref[...], 0.0)
    o_ref[...] = jnp.sum(h * w2_ref[...], axis=1, keepdims=True) + b2_ref[...]


def pallas_cls_head(x, w1, s1, t1, w2c, b2c):
    npad, c = x.shape
    tm = _tile_rows(npad, 512)
    return pl.pallas_call(
        _cls_kernel,
        out_shape=jax.ShapeDtypeStruct((npad, 1), F32),
        grid=(npad // tm,),
        in_specs=[pl.BlockSpec((tm, c), lambda i: (i, 0)),
                  pl.BlockSpec((c, c), lambda i: (0, 0)),
                  pl.BlockSpec((1, c), lambda i: (0, 0)),
                  pl.BlockSpec((1, c), lambda i: (0, 0)),
                  pl.BlockSpec((1, c), lambda i: (0, 0)),
                  pl.BlockSpec((1, 1), lambda i: (0, 0))],
        out_specs=pl.BlockSpec((tm, 1), lambda i: (i, 0)),
        compiler_params=_cparams(),
    )(x, w1, s1, t1, w2c, b2c)


# ============================================================ plain-JAX glue (pointops)
def knn_indices(nsample, p, o, new_p, new_o):
    parts = []
    for (s, e), (ns_, ne_) in zip(_segments(o), _segments(new_o)):
        d2 = jnp.sum((new_p[ns_:ne_, None, :] - p[None, s:e, :]) ** 2, axis=-1)
        kk = min(nsample, e - s)
        _, idx = jax.lax.top_k(-d2, kk)
        if kk < nsample:
            idx = jnp.concatenate([idx, jnp.tile(idx[:, -1:], (1, nsample - kk))], axis=1)
        parts.append(idx + s)
    return jnp.concatenate(parts, 0)


def farthest_point_sample(p, o, new_o):
    out = []
    for (s, e), (ns_, ne_) in zip(_segments(o), _segments(new_o)):
        m = ne_ - ns_
        seg = p[s:e]
        dists = jnp.sum((seg - seg[0]) ** 2, axis=-1)
        idx0 = jnp.zeros((m,), jnp.int32)

        def body(i, state):
            idx, dd = state
            nxt = jnp.argmax(dd).astype(jnp.int32)
            idx = idx.at[i].set(nxt)
            dd = jnp.minimum(dd, jnp.sum((seg - seg[nxt]) ** 2, axis=-1))
            return idx, dd

        idx, _ = jax.lax.fori_loop(1, m, body, (idx0, dists))
        out.append(idx + s)
    return jnp.concatenate(out, 0)


def interpolation(p_src, p_dst, feat_src, o_src, o_dst, k=3):
    outs = []
    for (ss, se), (ds, de) in zip(_segments(o_src), _segments(o_dst)):
        src_p, dst_p, src_f = p_src[ss:se], p_dst[ds:de], feat_src[ss:se]
        d2 = jnp.sum((dst_p[:, None, :] - src_p[None, :, :]) ** 2, axis=-1)
        kk = min(k, se - ss)
        neg, idx = jax.lax.top_k(-d2, kk)
        dist = jnp.sqrt(jnp.maximum(-neg, 0.0))
        w = 1.0 / (dist + 1e-8)
        w = w / jnp.sum(w, axis=1, keepdims=True)
        outs.append(jnp.sum(src_f[idx].astype(F32) * w[..., None], axis=1))
    return jnp.concatenate(outs, 0)


def downsample_offsets(o, stride):
    n_o, count = [o[0] // stride], o[0] // stride
    for i in range(1, len(o)):
        count += (o[i] - o[i - 1]) // stride
        n_o.append(count)
    return n_o


def _pack_rel(rel, npad):
    """(n, ns, 3) rel coords -> (npad, ns, 8): [x, y, z, 1, 0, 0, 0, 0].
       The constant-1 channel carries the linear_p biases through the MXU matmuls."""
    n, ns = rel.shape[0], rel.shape[1]
    r8 = jnp.concatenate([rel.astype(F32),
                          jnp.ones((n, ns, 1), F32),
                          jnp.zeros((n, ns, 4), F32)], axis=-1)
    return _pad_rows(r8, npad)


def stage_neighbors(p, o, nsample, npad):
    """Per-stage kNN + packed relative coords (shared by every block of the stage)."""
    idx = knn_indices(nsample, p, o, p, o)                       # (n, ns)
    rel = p[idx] - p[:, None, :]                                 # (n, ns, 3)
    return _pad_rows(idx, npad), _pack_rel(rel, npad)


# ========================================================================== parameters
class KeyGen:
    def __init__(self, seed):
        self.key = jax.random.PRNGKey(seed)

    def __call__(self):
        self.key, sub = jax.random.split(self.key)
        return sub


def init_linear(kg, cin, cout, bias=True):
    w = jax.random.normal(kg(), (cin, cout), F32) * (1.0 / np.sqrt(cin))
    b = 0.01 * jax.random.normal(kg(), (cout,), F32) if bias else None
    return {"w": w, "b": b}


def init_bn(kg, c):
    gamma = 1.0 + 0.05 * jax.random.normal(kg(), (c,), F32)
    beta = 0.05 * jax.random.normal(kg(), (c,), F32)
    return {"scale": gamma / np.sqrt(1.0 + 1e-5), "shift": beta}   # running mean=0, var=1


def init_pt_layer(kg, planes, share):
    return {
        "q": init_linear(kg, planes, planes),
        "k": init_linear(kg, planes, planes),
        "v": init_linear(kg, planes, planes),
        "p1": init_linear(kg, 3, 3),
        "p_bn": init_bn(kg, 3),
        "p2": init_linear(kg, 3, planes),
        "w_bn1": init_bn(kg, planes),
        "w1": init_linear(kg, planes, planes // share),
        "w_bn2": init_bn(kg, planes // share),
        "w2": init_linear(kg, planes // share, planes // share),
    }


def init_bottleneck(kg, planes, share):
    return {
        "linear1": init_linear(kg, planes, planes, bias=False),
        "bn1": init_bn(kg, planes),
        "transformer": init_pt_layer(kg, planes, share),
        "bn2": init_bn(kg, planes),
        "linear3": init_linear(kg, planes, planes, bias=False),
        "bn3": init_bn(kg, planes),
    }


def init_td(kg, cin, cout, stride):
    cin_eff = cin + 3 if stride != 1 else cin
    return {"linear": init_linear(kg, cin_eff, cout, bias=False), "bn": init_bn(kg, cout)}


def init_tu(kg, cin, cout):
    if cout is None:          # decoder head (dec5)
        return {"head": True,
                "linear1": init_linear(kg, 2 * cin, cin), "bn1": init_bn(kg, cin),
                "linear2": init_linear(kg, cin, cin)}
    return {"head": False,
            "linear1": init_linear(kg, cout, cout), "bn1": init_bn(kg, cout),
            "linear2": init_linear(kg, cin, cout), "bn2": init_bn(kg, cout)}


def build_params(kg):
    planes = [32, 64, 128, 256, 512]
    blocks = [1, 2, 3, 5, 2]                 # PointTransformerSeg50
    stride = [1, 4, 4, 4, 4]
    nsample = [8, 16, 16, 16, 16]
    share = 8
    in_planes = 6
    enc = []
    for i in range(5):
        td = init_td(kg, in_planes, planes[i], stride[i])
        in_planes = planes[i]
        enc.append({"td": td,
                    "blocks": [init_bottleneck(kg, in_planes, share) for _ in range(blocks[i])]})
    dec = []
    for i in [4, 3, 2, 1, 0]:
        tu = init_tu(kg, in_planes, None if i == 4 else planes[i])
        in_planes = planes[i]
        dec.append({"tu": tu, "blocks": [init_bottleneck(kg, in_planes, share)]})
    cls = {"lin1": init_linear(kg, planes[0], planes[0]),
           "bn1": init_bn(kg, planes[0]),
           "lin2": init_linear(kg, planes[0], 2)}
    cfg = dict(planes=planes, blocks=blocks, stride=stride, nsample=nsample, share=share)
    return {"enc": enc, "dec": dec, "cls": cls, "cfg": cfg}


# ----------------------------------------------------- BN folding / bf16 weight casting
def fold_lin(lin, bn=None):
    cout = lin["w"].shape[1]
    if bn is None:
        scale = jnp.ones((cout,), F32)
        shift = lin["b"] if lin["b"] is not None else jnp.zeros((cout,), F32)
    else:
        scale = bn["scale"]
        shift = bn["shift"] + (lin["b"] * bn["scale"] if lin["b"] is not None else 0.0)
    return {"w": lin["w"].astype(BF), "s": scale.reshape(1, -1), "t": shift.reshape(1, -1)}


def fold_td(raw, stride):
    f = fold_lin(raw["linear"], raw["bn"])
    if stride == 1:
        return f
    w = f["w"]                                          # (3 + cin, cout) bf16
    wr = jnp.zeros((8, w.shape[1]), BF).at[:3, :].set(w[:3, :])
    return {"wr": wr, "wf": w[3:, :], "s": f["s"], "t": f["t"]}


def fold_bottleneck(raw):
    t = raw["transformer"]
    c = t["q"]["w"].shape[0]
    l1 = fold_lin(raw["linear1"], raw["bn1"])
    wqkv = jnp.concatenate([t["q"]["w"], t["k"]["w"], t["v"]["w"]], axis=1).astype(BF)
    bqkv = jnp.concatenate([t["q"]["b"], t["k"]["b"], t["v"]["b"]]).reshape(1, -1)

    # linear_p layer 1 (Linear(3,3)+BN folded) in an (8,128) matrix; input channel 3 is
    # the constant-1 carrier: row 3 holds the bias and wp1[3,3]=1 keeps the carrier alive.
    w1p = t["p1"]["w"] * t["p_bn"]["scale"][None, :]
    b1p = t["p1"]["b"] * t["p_bn"]["scale"] + t["p_bn"]["shift"]
    wp1 = jnp.zeros((8, 128), F32)
    wp1 = wp1.at[:3, :3].set(w1p).at[3, :3].set(b1p).at[3, 3].set(1.0)
    # linear_p layer 2: rows 0..2 = weight, row 3 = bias (driven by the carrier channel).
    wp2 = jnp.zeros((128, c), F32)
    wp2 = wp2.at[:3, :].set(t["p2"]["w"]).at[3, :].set(t["p2"]["b"])

    ww1 = (t["w1"]["w"] * t["w_bn2"]["scale"][None, :]).astype(BF)
    bw1 = (t["w1"]["b"] * t["w_bn2"]["scale"] + t["w_bn2"]["shift"]).reshape(1, -1)
    l3 = fold_lin(raw["linear3"], raw["bn3"])

    aff = jnp.zeros((8, c), F32)
    aff = aff.at[0].set(t["w_bn1"]["scale"]).at[1].set(t["w_bn1"]["shift"])
    aff = aff.at[2].set(raw["bn2"]["scale"]).at[3].set(raw["bn2"]["shift"])
    aff = aff.at[4].set(l3["s"][0]).at[5].set(l3["t"][0])

    tw = {"aff": aff, "wp1": wp1.astype(BF), "wp2": wp2.astype(BF),
          "ww1": ww1, "bw1": bw1,
          "ww2": t["w2"]["w"].astype(BF), "bw2": t["w2"]["b"].reshape(1, -1),
          "w3": l3["w"]}
    return {"w1": l1["w"], "s1": l1["s"], "t1": l1["t"], "wqkv": wqkv, "bqkv": bqkv, "tw": tw}


def fold_params(raw):
    cfg = raw["cfg"]
    enc = [{"td": fold_td(st["td"], cfg["stride"][i]),
            "blocks": [fold_bottleneck(b) for b in st["blocks"]]}
           for i, st in enumerate(raw["enc"])]
    dec = []
    for d in raw["dec"]:
        tu = d["tu"]
        if tu["head"]:
            ftu = {"head": True, "l1": fold_lin(tu["linear1"], tu["bn1"]),
                   "l2": fold_lin(tu["linear2"], None)}
        else:
            ftu = {"head": False, "l1": fold_lin(tu["linear1"], tu["bn1"]),
                   "l2": fold_lin(tu["linear2"], tu["bn2"])}
        dec.append({"tu": ftu, "blocks": [fold_bottleneck(b) for b in d["blocks"]]})
    c1 = fold_lin(raw["cls"]["lin1"], raw["cls"]["bn1"])
    fcls = {"w1": c1["w"], "s1": c1["s"], "t1": c1["t"],
            "w2c": raw["cls"]["lin2"]["w"][:, 1].reshape(1, -1),
            "b2c": raw["cls"]["lin2"]["b"][1].reshape(1, 1)}
    return {"enc": enc, "dec": dec, "cls": fcls, "cfg": cfg}


# ============================================================================== modules
def bottleneck_forward(prm, x_pad, idx_pad, rel_pad, share):
    c = x_pad.shape[1]
    qkv = pallas_l1_qkv(x_pad, prm["w1"], prm["s1"], prm["t1"], prm["wqkv"], prm["bqkv"])
    xq = jax.lax.slice_in_dim(qkv, 0, c, axis=1)
    # TODO(synk): neighbour gathers remain XLA HBM gathers (column slice fuses into them).
    gk = jax.lax.slice_in_dim(qkv, c, 2 * c, axis=1)[idx_pad]
    gv = jax.lax.slice_in_dim(qkv, 2 * c, 3 * c, axis=1)[idx_pad]
    return pallas_attention_block(xq, gk, gv, rel_pad, x_pad, prm["tw"], share)


def transition_up_head(tu, x_pad, o, n, npad):
    segs = _segments(o)
    c = x_pad.shape[1]
    xf = x_pad[:n].astype(F32)
    means = jnp.stack([jnp.mean(xf[s:e], axis=0) for s, e in segs])
    mp = _round_up(means.shape[0], 8)
    g = pallas_linear(_pad_rows(means, mp).astype(BF),
                      tu["l2"]["w"], tu["l2"]["s"], tu["l2"]["t"], relu=True)
    parts = []
    for bi, (s, e) in enumerate(segs):
        rep = jnp.broadcast_to(g[bi], (e - s, c))
        parts.append(jnp.concatenate([x_pad[s:e], rep], axis=1))
    xcat = _pad_rows(jnp.concatenate(parts, 0), npad)
    return pallas_linear(xcat, tu["l1"]["w"], tu["l1"]["s"], tu["l1"]["t"], relu=True)


def transition_up(tu, x1_pad, n1, npad1, p1, o1, x2_pad, n2, p2, o2):
    a = pallas_linear(x1_pad, tu["l1"]["w"], tu["l1"]["s"], tu["l1"]["t"], relu=True)
    b = pallas_linear(x2_pad, tu["l2"]["w"], tu["l2"]["s"], tu["l2"]["t"], relu=True)
    up = interpolation(p2, p1, b[:n2], o2, o1)
    return a + _pad_rows(up, npad1).astype(a.dtype)


def point_transformer_seg50_forward(params, coord, feat, offset):
    cfg = params["cfg"]
    stride, nsample, share = cfg["stride"], cfg["nsample"], cfg["share"]
    o0 = [int(v) for v in np.asarray(offset)]            # mirrors pointops' host syncs
    n0 = o0[-1]
    npad0 = _round_up(n0, PAD_GRANULE)
    x0 = jnp.concatenate([coord, feat], axis=1)           # in_channels != 3 -> cat(coord, feat)
    x_pad = _pad_rows(x0, npad0).astype(BF)
    p, o, n, npad = coord, o0, n0, npad0

    skips, caches = [], []
    for i, stage in enumerate(params["enc"]):
        td = stage["td"]
        if stride[i] == 1:
            x_pad = pallas_linear(x_pad, td["w"], td["s"], td["t"], relu=True)
        else:
            n_o = downsample_offsets(o, stride[i])
            sel = farthest_point_sample(p, o, n_o)
            n_p = p[sel]
            m = n_o[-1]
            npad_new = _round_up(m, PAD_GRANULE)
            idx = knn_indices(nsample[i], p, o, n_p, n_o)
            rel8 = _pack_rel(p[idx] - n_p[:, None, :], npad_new)
            g = x_pad[_pad_rows(idx, npad_new)]            # (npad_new, ns, C) bf16 gather
            x_pad = pallas_group_linear_pool(rel8, g, td["wr"], td["wf"], td["s"], td["t"])
            p, o, n, npad = n_p, n_o, m, npad_new
        idx_pad, rel_pad = stage_neighbors(p, o, nsample[i], npad)       # shared by all blocks
        for blk in stage["blocks"]:
            x_pad = bottleneck_forward(blk, x_pad, idx_pad, rel_pad, share)
        skips.append((p, x_pad, o, n, npad))
        caches.append((idx_pad, rel_pad))

    feats = [None] * 5
    p5, x5, o5, n5, npad5 = skips[4]
    idx5, rel5 = caches[4]
    d5 = params["dec"][0]
    xh = transition_up_head(d5["tu"], x5, o5, n5, npad5)
    for blk in d5["blocks"]:
        xh = bottleneck_forward(blk, xh, idx5, rel5, share)
    feats[4] = xh
    for k, i in enumerate([3, 2, 1, 0]):
        dd = params["dec"][k + 1]
        p1, x1, o1, n1, npad1 = skips[i]
        p2, _, o2, n2, npad2 = skips[i + 1]
        idx1, rel1 = caches[i]
        xu = transition_up(dd["tu"], x1, n1, npad1, p1, o1, feats[i + 1], n2, p2, o2)
        for blk in dd["blocks"]:
            xu = bottleneck_forward(blk, xu, idx1, rel1, share)
        feats[i] = xu

    logits1 = pallas_cls_head(feats[0], params["cls"]["w1"], params["cls"]["s1"],
                              params["cls"]["t1"], params["cls"]["w2c"], params["cls"]["b2c"])
    return logits1[:n0, 0]                                # PointTransformerPointcept.forward


# ================================================================================ main
if __name__ == "__main__":
    n_per_batch, batch = 1024, 2
    key = jax.random.PRNGKey(0)
    k1, k2 = jax.random.split(key)
    coord = jax.random.uniform(k1, (batch * n_per_batch, 3), F32)          # "x" arg
    feat = jax.random.normal(k2, (batch * n_per_batch, 3), F32)            # "feat" arg
    offset = jnp.array([n_per_batch, 2 * n_per_batch], dtype=jnp.int32)    # "offset" arg

    params = fold_params(build_params(KeyGen(1234)))
    out = point_transformer_seg50_forward(params, coord, feat, offset)
    out = jax.block_until_ready(out)

    assert out.shape == (batch * n_per_batch,)
    assert bool(jnp.all(jnp.isfinite(out)))
    print("KERNEL_OK")
</pallas_src>

<mosaic_0001>
module attributes {stable_mosaic.version = 11 : i64} {
  func.func @_linear_kernel(%arg0: i32, %arg1: memref<512x6xbf16, #tpu.memory_space<vmem>>, %arg2: memref<6x32xbf16, #tpu.memory_space<vmem>>, %arg3: memref<1x32xf32, #tpu.memory_space<vmem>>, %arg4: memref<1x32xf32, #tpu.memory_space<vmem>>, %arg5: memref<512x32xbf16, #tpu.memory_space<vmem>>) attributes {dimension_semantics = [#tpu.dimension_semantics<parallel>], iteration_bounds = array<i64: 4>, scalar_prefetch = 0 : i64, scratch_operands = 0 : i64, tpu.core_type = #tpu.core_type<tc>, window_params = [{transform_indices = @transform_0, window_bounds = array<i64: 512, 6>}, {pipeline_mode = #tpu.pipeline_mode<synchronous>, transform_indices = @transform_1, window_bounds = array<i64: 6, 32>}, {pipeline_mode = #tpu.pipeline_mode<synchronous>, transform_indices = @transform_2, window_bounds = array<i64: 1, 32>}, {pipeline_mode = #tpu.pipeline_mode<synchronous>, transform_indices = @transform_3, window_bounds = array<i64: 1, 32>}, {transform_indices = @transform_4, window_bounds = array<i64: 512, 32>}]} {
    %c0 = arith.constant 0 : index
    %c0_0 = arith.constant 0 : index
    %0 = vector.load %arg1[%c0, %c0_0] : memref<512x6xbf16, #tpu.memory_space<vmem>>, vector<512x6xbf16>
    %c0_1 = arith.constant 0 : index
    %c0_2 = arith.constant 0 : index
    %1 = vector.load %arg2[%c0_1, %c0_2] : memref<6x32xbf16, #tpu.memory_space<vmem>>, vector<6x32xbf16>
    %cst = arith.constant dense<0.000000e+00> : vector<512x32xf32>
    %2 = tpu.matmul %0, %1, %cst {dimension_numbers = #tpu.dot_dimension_numbers<[1], [0], [0], [1], [0, 0, 1, 1], [], []>} : vector<512x6xbf16>, vector<6x32xbf16>, vector<512x32xf32> -> vector<512x32xf32>
    %c0_3 = arith.constant 0 : index
    %c0_4 = arith.constant 0 : index
    %3 = vector.load %arg3[%c0_3, %c0_4] : memref<1x32xf32, #tpu.memory_space<vmem>>, vector<1x32xf32>
    %4 = vector.broadcast %3 : vector<1x32xf32> to vector<512x32xf32>
    %5 = arith.mulf %2, %4 : vector<512x32xf32>
    %c0_5 = arith.constant 0 : index
    %c0_6 = arith.constant 0 : index
    %6 = vector.load %arg4[%c0_5, %c0_6] : memref<1x32xf32, #tpu.memory_space<vmem>>, vector<1x32xf32>
    %7 = vector.broadcast %6 : vector<1x32xf32> to vector<512x32xf32>
    %8 = arith.addf %5, %7 : vector<512x32xf32>
    %cst_7 = arith.constant 0.000000e+00 : f32
    %9 = vector.broadcast %cst_7 : f32 to vector<512x32xf32>
    %10 = arith.maximumf %8, %9 : vector<512x32xf32>
    %11 = arith.truncf %10 : vector<512x32xf32> to vector<512x32xbf16>
    %c0_8 = arith.constant 0 : index
    %c0_9 = arith.constant 0 : index
    %12 = vector.load %arg5[%c0_8, %c0_9] : memref<512x32xbf16, #tpu.memory_space<vmem>>, vector<512x32xbf16>
    tpu.vector_store %arg5[%c0_8, %c0_9], %11 {strides = array<i32>} : memref<512x32xbf16, #tpu.memory_space<vmem>>, vector<512x32xbf16>,
    return
  }
  func.func @transform_0(%arg0: i32) -> (i32, i32) {
    %c0_i32 = arith.constant 0 : i32
    %c0_i32_0 = arith.constant 0 : i32
    return %arg0, %c0_i32 : i32, i32
  }
  func.func @transform_1(%arg0: i32) -> (i32, i32) {
    %c0_i32 = arith.constant 0 : i32
    %c0_i32_0 = arith.constant 0 : i32
    %c0_i32_1 = arith.constant 0 : i32
    return %c0_i32, %c0_i32_0 : i32, i32
  }
  func.func @transform_2(%arg0: i32) -> (i32, i32) {
    %c0_i32 = arith.constant 0 : i32
    %c0_i32_0 = arith.constant 0 : i32
    %c0_i32_1 = arith.constant 0 : i32
    return %c0_i32, %c0_i32_0 : i32, i32
  }
  func.func @transform_3(%arg0: i32) -> (i32, i32) {
    %c0_i32 = arith.constant 0 : i32
    %c0_i32_0 = arith.constant 0 : i32
    %c0_i32_1 = arith.constant 0 : i32
    return %c0_i32, %c0_i32_0 : i32, i32
  }
  func.func @transform_4(%arg0: i32) -> (i32, i32) {
    %c0_i32 = arith.constant 0 : i32
    %c0_i32_0 = arith.constant 0 : i32
    return %arg0, %c0_i32 : i32, i32
  }
}

</mosaic_0001>

<llo_original>
// kernel: tpu_custom_call.1
$region0: #{tpu_custom_call.1}
  #allocation0 [shape = 'u32[]', space=smem, size = 0x4, offset = 0x4, fixed_abs, tag = 'smem constant byte address 0x4 - core index']
  #allocation1 [shape = 'u32[72,128]{1,0:T(1,128)}', space=vmem, size = 0x9000, scoped, tag = 'internal scratch']
  %s0 = inlined_call_operand.vmem [shape: bf16[2048,6], index: 0, kind: input, shape index: {}]
  %s1 = inlined_call_operand.vmem [shape: bf16[6,32], index: 1, kind: input, shape index: {}]
  %s2 = inlined_call_operand.vmem [shape: f32[1,32], index: 2, kind: input, shape index: {}]
  %s3 = inlined_call_operand.vmem [shape: f32[1,32], index: 3, kind: input, shape index: {}]
  %s4 = inlined_call_operand.vmem [shape: bf16[2048,32], index: 4, kind: output, shape index: {}]
  %s5 = sld [smem:[#allocation0]]
  $region49: #{tpu_custom_call.1} parent=0
    _
  %s7 = ssub.s32 1, %s5
  %s8 = scalar_select 0, %s7, %s5
  loop: start=0, step=1, limit=6
  $region2: #{tpu_custom_call.1} parent=0 // loop_pre_header
    _
  $region3: #{tpu_custom_call.1} parent=0 // loop_header
    %s10 = sphi 0, %s14
    %p11 = scmp.ge.s32.totalorder %s10, 6
    %s20 = sphi 0, %s22
    %s23 = sphi 0, %s20
    %s24 = sphi 0, %s23
    %s40 = sphi 0, %s24
    %s44 = sphi 0, %s44
    %s46 = sphi 0, %s44
    %s47 = sphi 0, %s46
    %s61 = sphi 0, %s47
    %s65 = sphi 0, %s65
    %s67 = sphi 0, %s65
    %s68 = sphi 0, %s67
    %s82 = sphi 0, %s68
    %s86 = sphi 0, %s86
    %s88 = sphi 0, %s86
    %s89 = sphi 0, %s88
    %s103 = sphi 0, %s89
    %s109 = sphi 0, %s111
    %s112 = sphi 0, %s109
    %s113 = sphi 0, %s112
    %s129 = sphi 0, %s113
  $region4: #{tpu_custom_call.1} parent=0 // loop_header_branch
    %13 = sbr.rel (%p11) target = $region8
  $region5: #{tpu_custom_call.1} parent=0 // loop_body
    %s15 = ssub.s32 %s10, 1
    %s16 = ssub.s32 %s10, 2
    %s17 = sadd.s32 %s10, 1
    %s18 = ssub.s32 %s10, %s17
    %p19 = scmp.eq.s32.totalorder %s18, 0
    %s21 = sadd.s32 %s20, 1
    %s22 = scalar_select %p19, %s20, %s21
    %p25 = pneg %p19
    %p26 = scmp.eq.s32.totalorder %s10, 3
    %p27 = por %p25, %p26
    %p28 = scmp.ne.s32.totalorder %s20, %s23
    %p29 = scmp.eq.s32.totalorder %s10, 0
    %p30 = por %p28, %p29
    %p31 = scmp.ne.s32.totalorder %s20, %s23
    %p32 = scmp.eq.s32.totalorder %s15, 3
    %p33 = por %p31, %p32
    %p34 = scmp.ne.s32.totalorder %s23, %s24
    %p35 = scmp.eq.s32.totalorder %s15, 0
    %p36 = por %p34, %p35
    %p37 = scmp.ne.s32.totalorder %s23, %s24
    %p38 = scmp.eq.s32.totalorder %s16, 3
    %p39 = por %p37, %p38
    %p41 = scmp.ne.s32.totalorder %s24, %s40
    %p42 = scmp.eq.s32.totalorder %s16, 0
    %p43 = por %p41, %p42
    %s45 = sadd.s32 %s44, 1
    %p48 = scmp.eq.s32.totalorder %s10, 3
    %p49 = scmp.ne.s32.totalorder %s44, %s46
    %p50 = scmp.eq.s32.totalorder %s10, 0
    %p51 = por %p49, %p50
    %p52 = scmp.ne.s32.totalorder %s44, %s46
    %p53 = scmp.eq.s32.totalorder %s15, 3
    %p54 = por %p52, %p53
    %p55 = scmp.ne.s32.totalorder %s46, %s47
    %p56 = scmp.eq.s32.totalorder %s15, 0
    %p57 = por %p55, %p56
    %p58 = scmp.ne.s32.totalorder %s46, %s47
    %p59 = scmp.eq.s32.totalorder %s16, 3
    %p60 = por %p58, %p59
    %p62 = scmp.ne.s32.totalorder %s47, %s61
    %p63 = scmp.eq.s32.totalorder %s16, 0
    %p64 = por %p62, %p63
    %s66 = sadd.s32 %s65, 1
    %p69 = scmp.eq.s32.totalorder %s10, 3
    %p70 = scmp.ne.s32.totalorder %s65, %s67
    %p71 = scmp.eq.s32.totalorder %s10, 0
    %p72 = por %p70, %p71
    %p73 = scmp.ne.s32.totalorder %s65, %s67
    %p74 = scmp.eq.s32.totalorder %s15, 3
    %p75 = por %p73, %p74
    %p76 = scmp.ne.s32.totalorder %s67, %s68
    %p77 = scmp.eq.s32.totalorder %s15, 0
    %p78 = por %p76, %p77
    %p79 = scmp.ne.s32.totalorder %s67, %s68
    %p80 = scmp.eq.s32.totalorder %s16, 3
    %p81 = por %p79, %p80
    %p83 = scmp.ne.s32.totalorder %s68, %s82
    %p84 = scmp.eq.s32.totalorder %s16, 0
    %p85 = por %p83, %p84
    %s87 = sadd.s32 %s86, 1
    %p90 = scmp.eq.s32.totalorder %s10, 3
    %p91 = scmp.ne.s32.totalorder %s86, %s88
    %p92 = scmp.eq.s32.totalorder %s10, 0
    %p93 = por %p91, %p92
    %p94 = scmp.ne.s32.totalorder %s86, %s88
    %p95 = scmp.eq.s32.totalorder %s15, 3
    %p96 = por %p94, %p95
    %p97 = scmp.ne.s32.totalorder %s88, %s89
    %p98 = scmp.eq.s32.totalorder %s15, 0
    %p99 = por %p97, %p98
    %p100 = scmp.ne.s32.totalorder %s88, %s89
    %p101 = scmp.eq.s32.totalorder %s16, 3
    %p102 = por %p100, %p101
    %p104 = scmp.ne.s32.totalorder %s89, %s103
    %p105 = scmp.eq.s32.totalorder %s16, 0
    %p106 = por %p104, %p105
    %s107 = ssub.s32 %s10, %s17
    %p108 = scmp.eq.s32.totalorder %s107, 0
    %s110 = sadd.s32 %s109, 1
    %s111 = scalar_select %p108, %s109, %s110
    %p114 = pneg %p108
    %p115 = scmp.eq.s32.totalorder %s10, 3
    %p116 = por %p114, %p115
    %p117 = scmp.ne.s32.totalorder %s109, %s112
    %p118 = scmp.eq.s32.totalorder %s10, 0
    %p119 = por %p117, %p118
    %p120 = scmp.ne.s32.totalorder %s109, %s112
    %p121 = scmp.eq.s32.totalorder %s15, 3
    %p122 = por %p120, %p121
    %p123 = scmp.ne.s32.totalorder %s112, %s113
    %p124 = scmp.eq.s32.totalorder %s15, 0
    %p125 = por %p123, %p124
    %p126 = scmp.ne.s32.totalorder %s112, %s113
    %p127 = scmp.eq.s32.totalorder %s16, 3
    %p128 = por %p126, %p127
    %p130 = scmp.ne.s32.totalorder %s113, %s129
    %p131 = scmp.eq.s32.totalorder %s16, 0
    %p132 = por %p130, %p131
    %p133 = scmp.le.s32.totalorder 1, %s10
    %p134 = scmp.lt.s32.totalorder %s10, 5
    %p135 = pnand %p133, %p134
    %p136 = pneg %p135
    // Predicated region
    $region9: #{tpu_custom_call.1} parent=5 // pred_check
      _
    $region10: #{tpu_custom_call.1} parent=5 // pred_check_branch
      %138 = sbr.rel (%p135) target = $region12
    $region11: #{tpu_custom_call.1} parent=5 // pred_region
      %s139 = ssub.s32 %s10, 1
      // Predicated region
      $region13: #{tpu_custom_call.1} parent=11 // pred_check
        %p140 = pneg %p57
      $region14: #{tpu_custom_call.1} parent=11 // pred_check_branch
        %142 = sbr.rel (%p140) target = $region16
      $region15: #{tpu_custom_call.1} parent=11 // pred_region
        _
      $region16: #{tpu_custom_call.1} parent=11 // pred_fallthru
        _
      // Predicated region
      $region17: #{tpu_custom_call.1} parent=11 // pred_check
        %p143 = pneg %p78
      $region18: #{tpu_custom_call.1} parent=11 // pred_check_branch
        %145 = sbr.rel (%p143) target = $region20
      $region19: #{tpu_custom_call.1} parent=11 // pred_region
        _
      $region20: #{tpu_custom_call.1} parent=11 // pred_fallthru
        _
      // Predicated region
      $region21: #{tpu_custom_call.1} parent=11 // pred_check
        %p146 = pneg %p99
      $region22: #{tpu_custom_call.1} parent=11 // pred_check_branch
        %148 = sbr.rel (%p146) target = $region24
      $region23: #{tpu_custom_call.1} parent=11 // pred_region
        _
      $region24: #{tpu_custom_call.1} parent=11 // pred_fallthru
        _
    $region12: #{tpu_custom_call.1} parent=5 // pred_fallthru
      _
    %p149 = scmp.lt.s32.totalorder %s10, 4
    // Predicated region
    $region25: #{tpu_custom_call.1} parent=5 // pred_check
      %p150 = pneg %p149
    $region26: #{tpu_custom_call.1} parent=5 // pred_check_branch
      %152 = sbr.rel (%p150) target = $region28
    $region27: #{tpu_custom_call.1} parent=5 // pred_region
      // Predicated region
      $region29: #{tpu_custom_call.1} parent=27 // pred_check
        %p153 = pneg %p30
      $region30: #{tpu_custom_call.1} parent=27 // pred_check_branch
        %155 = sbr.rel (%p153) target = $region32
      $region31: #{tpu_custom_call.1} parent=27 // pred_region
        %s156 = smul.u32 64, %s10
        %p157 = scmp.lt.s32.totalorder %s156, 255
        %s158 = scalar_select %p157, %s156, 255
        %s159 = smul.addr %s158, 4
        %s160 = scalar_lea.vmem %s0, %s159
        %s161 = smul.u32 64, %s10
      $region32: #{tpu_custom_call.1} parent=27 // pred_fallthru
        _
    $region28: #{tpu_custom_call.1} parent=5 // pred_fallthru
      _
    %p162 = scmp.le.s32.totalorder 1, %s10
    %p163 = scmp.lt.s32.totalorder %s10, 5
    %p164 = pnand %p162, %p163
    %p165 = pneg %p164
    // Predicated region
    $region33: #{tpu_custom_call.1} parent=5 // pred_check
      _
    $region34: #{tpu_custom_call.1} parent=5 // pred_check_branch
      %167 = sbr.rel (%p164) target = $region36
    $region35: #{tpu_custom_call.1} parent=5 // pred_region
      %s168 = ssub.s32 %s10, 1
      %s169 = smul.u32 64, %s15
      %p170 = scmp.lt.s32.totalorder %s169, 255
      %s171 = scalar_select %p170, %s169, 255
      %s172 = smul.addr %s171, 4
      %s173 = scalar_lea.vmem %s0, %s172
      %p174 = pneg %p36
      %p175 = pneg %p33
      %p176 = pneg %p57
      %p177 = pneg %p54
      %p178 = pneg %p78
      %p179 = pneg %p75
      %p180 = pneg %p99
      %p181 = pneg %p96
      %p182 = pneg %p125
      %p183 = pneg %p122
      %s184 = smul.u32 64, %s15
      %p185 = scmp.lt.s32.totalorder %s184, 255
      %s186 = scalar_select %p185, %s184, 255
      %s187 = smul.addr %s186, 4
      %s188 = scalar_lea.vmem %s4, %s187
      %s189 = smul.u32 64, %s15
      %p190 = scmp.lt.s32.totalorder %s189, 255
      %s191 = scalar_select %p190, %s189, 255
      %s192 = smul.addr %s191, 4
      %s193 = scalar_lea.vmem %s0, %s192
      %s194 = smul.u32 64, %s15
      %s195 = smul.u32 64, %s15
      %p196 = scmp.lt.s32.totalorder %s195, 255
      %s197 = scalar_select %p196, %s195, 255
      %s198 = smul.addr %s197, 4
      %s199 = scalar_lea.vmem %s4, %s198
      %s200 = smul.u32 64, %s15
      %v202 = vld [vmem:[%s193] sm:$0xf]
      %v203 = vld [vmem:[%s193 + $0x4] sm:$0xf]
      %v204 = vld [vmem:[%s193 + $0x8] sm:$0xf]
      %v205 = vld [vmem:[%s193 + $0xc] sm:$0xf]
      %v206 = vld [vmem:[%s193 + $0x10] sm:$0xf]
      %v207 = vld [vmem:[%s193 + $0x14] sm:$0xf]
      %v208 = vld [vmem:[%s193 + $0x18] sm:$0xf]
      %v209 = vld [vmem:[%s193 + $0x1c] sm:$0xf]
      %v210 = vld [vmem:[%s193 + $0x20] sm:$0xf]
      %v211 = vld [vmem:[%s193 + $0x24] sm:$0xf]
      %v212 = vld [vmem:[%s193 + $0x28] sm:$0xf]
      %v213 = vld [vmem:[%s193 + $0x2c] sm:$0xf]
      %v214 = vld [vmem:[%s193 + $0x30] sm:$0xf]
      %v215 = vld [vmem:[%s193 + $0x34] sm:$0xf]
      %v216 = vld [vmem:[%s193 + $0x38] sm:$0xf]
      %v217 = vld [vmem:[%s193 + $0x3c] sm:$0xf]
      %v218 = vld [vmem:[%s193 + $0x40] sm:$0xf]
      %v219 = vld [vmem:[%s193 + $0x44] sm:$0xf]
      %v220 = vld [vmem:[%s193 + $0x48] sm:$0xf]
      %v221 = vld [vmem:[%s193 + $0x4c] sm:$0xf]
      %v222 = vld [vmem:[%s193 + $0x50] sm:$0xf]
      %v223 = vld [vmem:[%s193 + $0x54] sm:$0xf]
      %v224 = vld [vmem:[%s193 + $0x58] sm:$0xf]
      %v225 = vld [vmem:[%s193 + $0x5c] sm:$0xf]
      %v226 = vld [vmem:[%s193 + $0x60] sm:$0xf]
      %v227 = vld [vmem:[%s193 + $0x64] sm:$0xf]
      %v228 = vld [vmem:[%s193 + $0x68] sm:$0xf]
      %v229 = vld [vmem:[%s193 + $0x6c] sm:$0xf]
      %v230 = vld [vmem:[%s193 + $0x70] sm:$0xf]
      %v231 = vld [vmem:[%s193 + $0x74] sm:$0xf]
      %v232 = vld [vmem:[%s193 + $0x78] sm:$0xf]
      %v233 = vld [vmem:[%s193 + $0x7c] sm:$0xf]
      %v234 = vld [vmem:[%s193 + $0x80] sm:$0xf]
      %v235 = vld [vmem:[%s193 + $0x84] sm:$0xf]
      %v236 = vld [vmem:[%s193 + $0x88] sm:$0xf]
      %v237 = vld [vmem:[%s193 + $0x8c] sm:$0xf]
      %v238 = vld [vmem:[%s193 + $0x90] sm:$0xf]
      %v239 = vld [vmem:[%s193 + $0x94] sm:$0xf]
      %v240 = vld [vmem:[%s193 + $0x98] sm:$0xf]
      %v241 = vld [vmem:[%s193 + $0x9c] sm:$0xf]
      %v242 = vld [vmem:[%s193 + $0xa0] sm:$0xf]
      %v243 = vld [vmem:[%s193 + $0xa4] sm:$0xf]
      %v244 = vld [vmem:[%s193 + $0xa8] sm:$0xf]
      %v245 = vld [vmem:[%s193 + $0xac] sm:$0xf]
      %v246 = vld [vmem:[%s193 + $0xb0] sm:$0xf]
      %v247 = vld [vmem:[%s193 + $0xb4] sm:$0xf]
      %v248 = vld [vmem:[%s193 + $0xb8] sm:$0xf]
      %v249 = vld [vmem:[%s193 + $0xbc] sm:$0xf]
      %v250 = vld [vmem:[%s193 + $0xc0] sm:$0xf]
      %v251 = vld [vmem:[%s193 + $0xc4] sm:$0xf]
      %v252 = vld [vmem:[%s193 + $0xc8] sm:$0xf]
      %v253 = vld [vmem:[%s193 + $0xcc] sm:$0xf]
      %v254 = vld [vmem:[%s193 + $0xd0] sm:$0xf]
      %v255 = vld [vmem:[%s193 + $0xd4] sm:$0xf]
      %v256 = vld [vmem:[%s193 + $0xd8] sm:$0xf]
      %v257 = vld [vmem:[%s193 + $0xdc] sm:$0xf]
      %v258 = vld [vmem:[%s193 + $0xe0] sm:$0xf]
      %v259 = vld [vmem:[%s193 + $0xe4] sm:$0xf]
      %v260 = vld [vmem:[%s193 + $0xe8] sm:$0xf]
      %v261 = vld [vmem:[%s193 + $0xec] sm:$0xf]
      %v262 = vld [vmem:[%s193 + $0xf0] sm:$0xf]
      %v263 = vld [vmem:[%s193 + $0xf4] sm:$0xf]
      %v264 = vld [vmem:[%s193 + $0xf8] sm:$0xf]
      %v265 = vld [vmem:[%s193 + $0xfc] sm:$0xf]
      %v266 = vld [vmem:[%s1] sm:$0x7]
      %v331 = vunpack.c.l.b16 %v202
      %v332 = vunpack.c.l.b16 %v203
      %v333 = vunpack.c.l.b16 %v204
      %v334 = vunpack.c.l.b16 %v205
      %v335 = vunpack.c.l.b16 %v206
      %v336 = vunpack.c.l.b16 %v207
      %v337 = vunpack.c.l.b16 %v208
      %v338 = vunpack.c.l.b16 %v209
      %v339 = vunpack.c.l.b16 %v210
      %v340 = vunpack.c.l.b16 %v211
      %v341 = vunpack.c.l.b16 %v212
      %v342 = vunpack.c.l.b16 %v213
      %v343 = vunpack.c.l.b16 %v214
      %v344 = vunpack.c.l.b16 %v215
      %v345 = vunpack.c.l.b16 %v216
      %v346 = vunpack.c.l.b16 %v217
      %v347 = vunpack.c.l.b16 %v218
      %v348 = vunpack.c.l.b16 %v219
      %v349 = vunpack.c.l.b16 %v220
      %v350 = vunpack.c.l.b16 %v221
      %v351 = vunpack.c.l.b16 %v222
      %v352 = vunpack.c.l.b16 %v223
      %v353 = vunpack.c.l.b16 %v224
      %v354 = vunpack.c.l.b16 %v225
      %v355 = vunpack.c.l.b16 %v226
      %v356 = vunpack.c.l.b16 %v227
      %v357 = vunpack.c.l.b16 %v228
      %v358 = vunpack.c.l.b16 %v229
      %v359 = vunpack.c.l.b16 %v230
      %v360 = vunpack.c.l.b16 %v231
      %v361 = vunpack.c.l.b16 %v232
      %v362 = vunpack.c.l.b16 %v233
      %v363 = vunpack.c.l.b16 %v234
      %v364 = vunpack.c.l.b16 %v235
      %v365 = vunpack.c.l.b16 %v236
      %v366 = vunpack.c.l.b16 %v237
      %v367 = vunpack.c.l.b16 %v238
      %v368 = vunpack.c.l.b16 %v239
      %v369 = vunpack.c.l.b16 %v240
      %v370 = vunpack.c.l.b16 %v241
      %v371 = vunpack.c.l.b16 %v242
      %v372 = vunpack.c.l.b16 %v243
      %v373 = vunpack.c.l.b16 %v244
      %v374 = vunpack.c.l.b16 %v245
      %v375 = vunpack.c.l.b16 %v246
      %v376 = vunpack.c.l.b16 %v247
      %v377 = vunpack.c.l.b16 %v248
      %v378 = vunpack.c.l.b16 %v249
      %v379 = vunpack.c.l.b16 %v250
      %v380 = vunpack.c.l.b16 %v251
      %v381 = vunpack.c.l.b16 %v252
      %v382 = vunpack.c.l.b16 %v253
      %v383 = vunpack.c.l.b16 %v254
      %v384 = vunpack.c.l.b16 %v255
      %v385 = vunpack.c.l.b16 %v256
      %v386 = vunpack.c.l.b16 %v257
      %v387 = vunpack.c.l.b16 %v258
      %v388 = vunpack.c.l.b16 %v259
      %v389 = vunpack.c.l.b16 %v260
      %v390 = vunpack.c.l.b16 %v261
      %v391 = vunpack.c.l.b16 %v262
      %v392 = vunpack.c.l.b16 %v263
      %v393 = vunpack.c.l.b16 %v264
      %v394 = vunpack.c.l.b16 %v265
      %v395 = vpack.c.b16 %v332, %v331
      %v396 = vpack.c.b16 %v334, %v333
      %v397 = vpack.c.b16 %v336, %v335
      %v398 = vpack.c.b16 %v338, %v337
      %v399 = vpack.c.b16 %v340, %v339
      %v400 = vpack.c.b16 %v342, %v341
      %v401 = vpack.c.b16 %v344, %v343
      %v402 = vpack.c.b16 %v346, %v345
      %v403 = vpack.c.b16 %v348, %v347
      %v404 = vpack.c.b16 %v350, %v349
      %v405 = vpack.c.b16 %v352, %v351
      %v406 = vpack.c.b16 %v354, %v353
      %v407 = vpack.c.b16 %v356, %v355
      %v408 = vpack.c.b16 %v358, %v357
      %v409 = vpack.c.b16 %v360, %v359
      %v410 = vpack.c.b16 %v362, %v361
      %v411 = vpack.c.b16 %v364, %v363
      %v412 = vpack.c.b16 %v366, %v365
      %v413 = vpack.c.b16 %v368, %v367
      %v414 = vpack.c.b16 %v370, %v369
      %v415 = vpack.c.b16 %v372, %v371
      %v416 = vpack.c.b16 %v374, %v373
      %v417 = vpack.c.b16 %v376, %v375
      %v418 = vpack.c.b16 %v378, %v377
      %v419 = vpack.c.b16 %v380, %v379
      %v420 = vpack.c.b16 %v382, %v381
      %v421 = vpack.c.b16 %v384, %v383
      %v422 = vpack.c.b16 %v386, %v385
      %v423 = vpack.c.b16 %v388, %v387
      %v424 = vpack.c.b16 %v390, %v389
      %v425 = vpack.c.b16 %v392, %v391
      %v426 = vpack.c.b16 %v394, %v393
      %vm427 = vcmask 48128
      %v429 = vsel %vm427, %v395, 0
      %v432 = vsel %vm427, %v396, 0
      %v435 = vsel %vm427, %v397, 0
      %v438 = vsel %vm427, %v398, 0
      %v441 = vsel %vm427, %v399, 0
      %v444 = vsel %vm427, %v400, 0
      %v447 = vsel %vm427, %v401, 0
      %v450 = vsel %vm427, %v402, 0
      %v453 = vsel %vm427, %v403, 0
      %v456 = vsel %vm427, %v404, 0
      %v459 = vsel %vm427, %v405, 0
      %v462 = vsel %vm427, %v406, 0
      %v465 = vsel %vm427, %v407, 0
      %v468 = vsel %vm427, %v408, 0
      %v471 = vsel %vm427, %v409, 0
      %v474 = vsel %vm427, %v410, 0
      %v477 = vsel %vm427, %v411, 0
      %v480 = vsel %vm427, %v412, 0
      %v483 = vsel %vm427, %v413, 0
      %v486 = vsel %vm427, %v414, 0
      %v489 = vsel %vm427, %v415, 0
      %v492 = vsel %vm427, %v416, 0
      %v495 = vsel %vm427, %v417, 0
      %v498 = vsel %vm427, %v418, 0
      %v501 = vsel %vm427, %v419, 0
      %v504 = vsel %vm427, %v420, 0
      %v507 = vsel %vm427, %v421, 0
      %v510 = vsel %vm427, %v422, 0
      %v513 = vsel %vm427, %v423, 0
      %v516 = vsel %vm427, %v424, 0
      %v519 = vsel %vm427, %v425, 0
      %v522 = vsel %vm427, %v426, 0
      %vm524 = vcmask 1042432
      %v526 = vsel %vm524, %v266, 0
      %528 = vmatpush.bf16.msra.mxu0 0
      %529 = vmatpush.bf16.msra.mxu0 0
      %530 = vmatpush.bf16.msra.mxu0 0
      %531 = vmatpush.bf16.msra.mxu0 0
      %532 = vmatpush.bf16.msra.mxu0 0
      %533 = vmatpush.bf16.msra.mxu0 0
      %534 = vmatpush.bf16.msra.mxu0 0
      %535 = vmatpush.bf16.msra.mxu0 %v526
      %536 = vmatmul.bf16.gmra.mxu0 %v429
      %v537 = vpop.f32.mrf.mxu0
      %v538 = vadd.f32 0.0, %v537
      %v539 = vpop.f32.mrf.mxu0
      %v540 = vadd.f32 0.0, %v539
      %541 = vmatmul.bf16.gmra.mxu0 %v432
      %v542 = vpop.f32.mrf.mxu0
      %v543 = vadd.f32 0.0, %v542
      %v544 = vpop.f32.mrf.mxu0
      %v545 = vadd.f32 0.0, %v544
      %546 = vmatmul.bf16.gmra.mxu0 %v435
      %v547 = vpop.f32.mrf.mxu0
      %v548 = vadd.f32 0.0, %v547
      %v549 = vpop.f32.mrf.mxu0
      %v550 = vadd.f32 0.0, %v549
      %551 = vmatmul.bf16.gmra.mxu0 %v438
      %v552 = vpop.f32.mrf.mxu0
      %v553 = vadd.f32 0.0, %v552
      %v554 = vpop.f32.mrf.mxu0
      %v555 = vadd.f32 0.0, %v554
      %556 = vmatmul.bf16.gmra.mxu0 %v441
      %v557 = vpop.f32.mrf.mxu0
      %v558 = vadd.f32 0.0, %v557
      %v559 = vpop.f32.mrf.mxu0
      %v560 = vadd.f32 0.0, %v559
      %561 = vmatmul.bf16.gmra.mxu0 %v444
      %v562 = vpop.f32.mrf.mxu0
      %v563 = vadd.f32 0.0, %v562
      %v564 = vpop.f32.mrf.mxu0
      %v565 = vadd.f32 0.0, %v564
      %566 = vmatmul.bf16.gmra.mxu0 %v447
      %v567 = vpop.f32.mrf.mxu0
      %v568 = vadd.f32 0.0, %v567
      %v569 = vpop.f32.mrf.mxu0
      %v570 = vadd.f32 0.0, %v569
      %571 = vmatmul.bf16.gmra.mxu0 %v450
      %v572 = vpop.f32.mrf.mxu0
      %v573 = vadd.f32 0.0, %v572
      %v574 = vpop.f32.mrf.mxu0
      %v575 = vadd.f32 0.0, %v574
      %576 = vmatmul.bf16.gmra.mxu0 %v453
      %v577 = vpop.f32.mrf.mxu0
      %v578 = vadd.f32 0.0, %v577
      %v579 = vpop.f32.mrf.mxu0
      %v580 = vadd.f32 0.0, %v579
      %581 = vmatmul.bf16.gmra.mxu0 %v456
      %v582 = vpop.f32.mrf.mxu0
      %v583 = vadd.f32 0.0, %v582
      %v584 = vpop.f32.mrf.mxu0
      %v585 = vadd.f32 0.0, %v584
      %586 = vmatmul.bf16.gmra.mxu0 %v459
      %v587 = vpop.f32.mrf.mxu0
      %v588 = vadd.f32 0.0, %v587
      %v589 = vpop.f32.mrf.mxu0
      %v590 = vadd.f32 0.0, %v589
      %591 = vmatmul.bf16.gmra.mxu0 %v462
      %v592 = vpop.f32.mrf.mxu0
      %v593 = vadd.f32 0.0, %v592
      %v594 = vpop.f32.mrf.mxu0
      %v595 = vadd.f32 0.0, %v594
      %596 = vmatmul.bf16.gmra.mxu0 %v465
      %v597 = vpop.f32.mrf.mxu0
      %v598 = vadd.f32 0.0, %v597
      %v599 = vpop.f32.mrf.mxu0
      %v600 = vadd.f32 0.0, %v599
      %601 = vmatmul.bf16.gmra.mxu0 %v468
      %v602 = vpop.f32.mrf.mxu0
      %v603 = vadd.f32 0.0, %v602
      %v604 = vpop.f32.mrf.mxu0
      %v605 = vadd.f32 0.0, %v604
      %606 = vmatmul.bf16.gmra.mxu0 %v471
      %v607 = vpop.f32.mrf.mxu0
      %v608 = vadd.f32 0.0, %v607
      %v609 = vpop.f32.mrf.mxu0
      %v610 = vadd.f32 0.0, %v609
      %611 = vmatmul.bf16.gmra.mxu0 %v474
      %v612 = vpop.f32.mrf.mxu0
      %v613 = vadd.f32 0.0, %v612
      %v614 = vpop.f32.mrf.mxu0
      %v615 = vadd.f32 0.0, %v614
      %616 = vmatmul.bf16.gmra.mxu0 %v477
      %v617 = vpop.f32.mrf.mxu0
      %v618 = vadd.f32 0.0, %v617
      %v619 = vpop.f32.mrf.mxu0
      %v620 = vadd.f32 0.0, %v619
      %621 = vmatmul.bf16.gmra.mxu0 %v480
      %v622 = vpop.f32.mrf.mxu0
      %v623 = vadd.f32 0.0, %v622
      %v624 = vpop.f32.mrf.mxu0
      %v625 = vadd.f32 0.0, %v624
      %626 = vmatmul.bf16.gmra.mxu0 %v483
      %v627 = vpop.f32.mrf.mxu0
      %v628 = vadd.f32 0.0, %v627
      %v629 = vpop.f32.mrf.mxu0
      %v630 = vadd.f32 0.0, %v629
      %631 = vmatmul.bf16.gmra.mxu0 %v486
      %v632 = vpop.f32.mrf.mxu0
      %v633 = vadd.f32 0.0, %v632
      %v634 = vpop.f32.mrf.mxu0
      %v635 = vadd.f32 0.0, %v634
      %636 = vmatmul.bf16.gmra.mxu0 %v489
      %v637 = vpop.f32.mrf.mxu0
      %v638 = vadd.f32 0.0, %v637
      %v639 = vpop.f32.mrf.mxu0
      %v640 = vadd.f32 0.0, %v639
      %641 = vmatmul.bf16.gmra.mxu0 %v492
      %v642 = vpop.f32.mrf.mxu0
      %v643 = vadd.f32 0.0, %v642
      %v644 = vpop.f32.mrf.mxu0
      %v645 = vadd.f32 0.0, %v644
      %646 = vmatmul.bf16.gmra.mxu0 %v495
      %v647 = vpop.f32.mrf.mxu0
      %v648 = vadd.f32 0.0, %v647
      %v649 = vpop.f32.mrf.mxu0
      %v650 = vadd.f32 0.0, %v649
      %651 = vmatmul.bf16.gmra.mxu0 %v498
      %v652 = vpop.f32.mrf.mxu0
      %v653 = vadd.f32 0.0, %v652
      %v654 = vpop.f32.mrf.mxu0
      %v655 = vadd.f32 0.0, %v654
      %656 = vmatmul.bf16.gmra.mxu0 %v501
      %v657 = vpop.f32.mrf.mxu0
      %v658 = vadd.f32 0.0, %v657
      %v659 = vpop.f32.mrf.mxu0
      %v660 = vadd.f32 0.0, %v659
      %661 = vmatmul.bf16.gmra.mxu0 %v504
      %v662 = vpop.f32.mrf.mxu0
      %v663 = vadd.f32 0.0, %v662
      %v664 = vpop.f32.mrf.mxu0
      %v665 = vadd.f32 0.0, %v664
      %666 = vmatmul.bf16.gmra.mxu0 %v507
      %v667 = vpop.f32.mrf.mxu0
      %v668 = vadd.f32 0.0, %v667
      %v669 = vpop.f32.mrf.mxu0
      %v670 = vadd.f32 0.0, %v669
      %671 = vmatmul.bf16.gmra.mxu0 %v510
      %v672 = vpop.f32.mrf.mxu0
      %v673 = vadd.f32 0.0, %v672
      %v674 = vpop.f32.mrf.mxu0
      %v675 = vadd.f32 0.0, %v674
      %676 = vmatmul.bf16.gmra.mxu0 %v513
      %v677 = vpop.f32.mrf.mxu0
      %v678 = vadd.f32 0.0, %v677
      %v679 = vpop.f32.mrf.mxu0
      %v680 = vadd.f32 0.0, %v679
      %681 = vmatmul.bf16.gmra.mxu0 %v516
      %v682 = vpop.f32.mrf.mxu0
      %v683 = vadd.f32 0.0, %v682
      %v684 = vpop.f32.mrf.mxu0
      %v685 = vadd.f32 0.0, %v684
      %686 = vmatmul.bf16.gmra.mxu0 %v519
      %v687 = vpop.f32.mrf.mxu0
      %v688 = vadd.f32 0.0, %v687
      %v689 = vpop.f32.mrf.mxu0
      %v690 = vadd.f32 0.0, %v689
      %691 = vmatmul.bf16.gmra.mxu0 %v522
      %v692 = vpop.f32.mrf.mxu0
      %v693 = vadd.f32 0.0, %v692
      %v694 = vpop.f32.mrf.mxu0
      %v695 = vadd.f32 0.0, %v694
      %696 = vdwg.mxu0
      %v697 = vld [vmem:[%s2] sm:$0x1]
      %v699 = vperm.slane %v697, 0
      %v701 = vmul.f32 %v538, %v699
      %v702 = vmul.f32 %v540, %v699
      %v703 = vmul.f32 %v543, %v699
      %v704 = vmul.f32 %v545, %v699
      %v705 = vmul.f32 %v548, %v699
      %v706 = vmul.f32 %v550, %v699
      %v707 = vmul.f32 %v553, %v699
      %v708 = vmul.f32 %v555, %v699
      %v709 = vmul.f32 %v558, %v699
      %v710 = vmul.f32 %v560, %v699
      %v711 = vmul.f32 %v563, %v699
      %v712 = vmul.f32 %v565, %v699
      %v713 = vmul.f32 %v568, %v699
      %v714 = vmul.f32 %v570, %v699
      %v715 = vmul.f32 %v573, %v699
      %v716 = vmul.f32 %v575, %v699
      %v717 = vmul.f32 %v578, %v699
      %v718 = vmul.f32 %v580, %v699
      %v719 = vmul.f32 %v583, %v699
      %v720 = vmul.f32 %v585, %v699
      %v721 = vmul.f32 %v588, %v699
      %v722 = vmul.f32 %v590, %v699
      %v723 = vmul.f32 %v593, %v699
      %v724 = vmul.f32 %v595, %v699
      %v725 = vmul.f32 %v598, %v699
      %v726 = vmul.f32 %v600, %v699
      %v727 = vmul.f32 %v603, %v699
      %v728 = vmul.f32 %v605, %v699
      %v729 = vmul.f32 %v608, %v699
      %v730 = vmul.f32 %v610, %v699
      %v731 = vmul.f32 %v613, %v699
      %v732 = vmul.f32 %v615, %v699
      %v733 = vmul.f32 %v618, %v699
      %v734 = vmul.f32 %v620, %v699
      %v735 = vmul.f32 %v623, %v699
      %v736 = vmul.f32 %v625, %v699
      %v737 = vmul.f32 %v628, %v699
      %v738 = vmul.f32 %v630, %v699
      %v739 = vmul.f32 %v633, %v699
      %v740 = vmul.f32 %v635, %v699
      %v741 = vmul.f32 %v638, %v699
      %v742 = vmul.f32 %v640, %v699
      %v743 = vmul.f32 %v643, %v699
      %v744 = vmul.f32 %v645, %v699
      %v745 = vmul.f32 %v648, %v699
      %v746 = vmul.f32 %v650, %v699
      %v747 = vmul.f32 %v653, %v699
      %v748 = vmul.f32 %v655, %v699
      %v749 = vmul.f32 %v658, %v699
      %v750 = vmul.f32 %v660, %v699
      %v751 = vmul.f32 %v663, %v699
      %v752 = vmul.f32 %v665, %v699
      %v753 = vmul.f32 %v668, %v699
      %v754 = vmul.f32 %v670, %v699
      %v755 = vmul.f32 %v673, %v699
      %v756 = vmul.f32 %v675, %v699
      %v757 = vmul.f32 %v678, %v699
      %v758 = vmul.f32 %v680, %v699
      %v759 = vmul.f32 %v683, %v699
      %v760 = vmul.f32 %v685, %v699
      %v761 = vmul.f32 %v688, %v699
      %v762 = vmul.f32 %v690, %v699
      %v763 = vmul.f32 %v693, %v699
      %v764 = vmul.f32 %v695, %v699
      %v765 = vld [vmem:[%s3] sm:$0x1]
      %v767 = vperm.slane %v765, 0
      %v769 = vadd.f32 %v701, %v767
      %v770 = vadd.f32 %v702, %v767
      %v771 = vadd.f32 %v703, %v767
      %v772 = vadd.f32 %v704, %v767
      %v773 = vadd.f32 %v705, %v767
      %v774 = vadd.f32 %v706, %v767
      %v775 = vadd.f32 %v707, %v767
      %v776 = vadd.f32 %v708, %v767
      %v777 = vadd.f32 %v709, %v767
      %v778 = vadd.f32 %v710, %v767
      %v779 = vadd.f32 %v711, %v767
      %v780 = vadd.f32 %v712, %v767
      %v781 = vadd.f32 %v713, %v767
      %v782 = vadd.f32 %v714, %v767
      %v783 = vadd.f32 %v715, %v767
      %v784 = vadd.f32 %v716, %v767
      %v785 = vadd.f32 %v717, %v767
      %v786 = vadd.f32 %v718, %v767
      %v787 = vadd.f32 %v719, %v767
      %v788 = vadd.f32 %v720, %v767
      %v789 = vadd.f32 %v721, %v767
      %v790 = vadd.f32 %v722, %v767
      %v791 = vadd.f32 %v723, %v767
      %v792 = vadd.f32 %v724, %v767
      %v793 = vadd.f32 %v725, %v767
      %v794 = vadd.f32 %v726, %v767
      %v795 = vadd.f32 %v727, %v767
      %v796 = vadd.f32 %v728, %v767
      %v797 = vadd.f32 %v729, %v767
      %v798 = vadd.f32 %v730, %v767
      %v799 = vadd.f32 %v731, %v767
      %v800 = vadd.f32 %v732, %v767
      %v801 = vadd.f32 %v733, %v767
      %v802 = vadd.f32 %v734, %v767
      %v803 = vadd.f32 %v735, %v767
      %v804 = vadd.f32 %v736, %v767
      %v805 = vadd.f32 %v737, %v767
      %v806 = vadd.f32 %v738, %v767
      %v807 = vadd.f32 %v739, %v767
      %v808 = vadd.f32 %v740, %v767
      %v809 = vadd.f32 %v741, %v767
      %v810 = vadd.f32 %v742, %v767
      %v811 = vadd.f32 %v743, %v767
      %v812 = vadd.f32 %v744, %v767
      %v813 = vadd.f32 %v745, %v767
      %v814 = vadd.f32 %v746, %v767
      %v815 = vadd.f32 %v747, %v767
      %v816 = vadd.f32 %v748, %v767
      %v817 = vadd.f32 %v749, %v767
      %v818 = vadd.f32 %v750, %v767
      %v819 = vadd.f32 %v751, %v767
      %v820 = vadd.f32 %v752, %v767
      %v821 = vadd.f32 %v753, %v767
      %v822 = vadd.f32 %v754, %v767
      %v823 = vadd.f32 %v755, %v767
      %v824 = vadd.f32 %v756, %v767
      %v825 = vadd.f32 %v757, %v767
      %v826 = vadd.f32 %v758, %v767
      %v827 = vadd.f32 %v759, %v767
      %v828 = vadd.f32 %v760, %v767
      %v829 = vadd.f32 %v761, %v767
      %v830 = vadd.f32 %v762, %v767
      %v831 = vadd.f32 %v763, %v767
      %v832 = vadd.f32 %v764, %v767
      %v833 = vmax.f32 %v769, 0.0
      %v834 = vmax.f32 %v770, 0.0
      %v835 = vmax.f32 %v771, 0.0
      %v836 = vmax.f32 %v772, 0.0
      %v837 = vmax.f32 %v773, 0.0
      %v838 = vmax.f32 %v774, 0.0
      %v839 = vmax.f32 %v775, 0.0
      %v840 = vmax.f32 %v776, 0.0
      %v841 = vmax.f32 %v777, 0.0
      %v842 = vmax.f32 %v778, 0.0
      %v843 = vmax.f32 %v779, 0.0
      %v844 = vmax.f32 %v780, 0.0
      %v845 = vmax.f32 %v781, 0.0
      %v846 = vmax.f32 %v782, 0.0
      %v847 = vmax.f32 %v783, 0.0
      %v848 = vmax.f32 %v784, 0.0
      %v849 = vmax.f32 %v785, 0.0
      %v850 = vmax.f32 %v786, 0.0
      %v851 = vmax.f32 %v787, 0.0
      %v852 = vmax.f32 %v788, 0.0
      %v853 = vmax.f32 %v789, 0.0
      %v854 = vmax.f32 %v790, 0.0
      %v855 = vmax.f32 %v791, 0.0
      %v856 = vmax.f32 %v792, 0.0
      %v857 = vmax.f32 %v793, 0.0
      %v858 = vmax.f32 %v794, 0.0
      %v859 = vmax.f32 %v795, 0.0
      %v860 = vmax.f32 %v796, 0.0
      %v861 = vmax.f32 %v797, 0.0
      %v862 = vmax.f32 %v798, 0.0
      %v863 = vmax.f32 %v799, 0.0
      %v864 = vmax.f32 %v800, 0.0
      %v865 = vmax.f32 %v801, 0.0
      %v866 = vmax.f32 %v802, 0.0
      %v867 = vmax.f32 %v803, 0.0
      %v868 = vmax.f32 %v804, 0.0
      %v869 = vmax.f32 %v805, 0.0
      %v870 = vmax.f32 %v806, 0.0
      %v871 = vmax.f32 %v807, 0.0
      %v872 = vmax.f32 %v808, 0.0
      %v873 = vmax.f32 %v809, 0.0
      %v874 = vmax.f32 %v810, 0.0
      %v875 = vmax.f32 %v811, 0.0
      %v876 = vmax.f32 %v812, 0.0
      %v877 = vmax.f32 %v813, 0.0
      %v878 = vmax.f32 %v814, 0.0
      %v879 = vmax.f32 %v815, 0.0
      %v880 = vmax.f32 %v816, 0.0
      %v881 = vmax.f32 %v817, 0.0
      %v882 = vmax.f32 %v818, 0.0
      %v883 = vmax.f32 %v819, 0.0
      %v884 = vmax.f32 %v820, 0.0
      %v885 = vmax.f32 %v821, 0.0
      %v886 = vmax.f32 %v822, 0.0
      %v887 = vmax.f32 %v823, 0.0
      %v888 = vmax.f32 %v824, 0.0
      %v889 = vmax.f32 %v825, 0.0
      %v890 = vmax.f32 %v826, 0.0
      %v891 = vmax.f32 %v827, 0.0
      %v892 = vmax.f32 %v828, 0.0
      %v893 = vmax.f32 %v829, 0.0
      %v894 = vmax.f32 %v830, 0.0
      %v895 = vmax.f32 %v831, 0.0
      %v896 = vmax.f32 %v832, 0.0
      %v897 = vpack.c.bf16 %v833, %v833
      %v898 = vpack.c.bf16 %v834, %v834
      %v899 = vpack.c.bf16 %v835, %v835
      %v900 = vpack.c.bf16 %v836, %v836
      %v901 = vpack.c.bf16 %v837, %v837
      %v902 = vpack.c.bf16 %v838, %v838
      %v903 = vpack.c.bf16 %v839, %v839
      %v904 = vpack.c.bf16 %v840, %v840
      %v905 = vpack.c.bf16 %v841, %v841
      %v906 = vpack.c.bf16 %v842, %v842
      %v907 = vpack.c.bf16 %v843, %v843
      %v908 = vpack.c.bf16 %v844, %v844
      %v909 = vpack.c.bf16 %v845, %v845
      %v910 = vpack.c.bf16 %v846, %v846
      %v911 = vpack.c.bf16 %v847, %v847
      %v912 = vpack.c.bf16 %v848, %v848
      %v913 = vpack.c.bf16 %v849, %v849
      %v914 = vpack.c.bf16 %v850, %v850
      %v915 = vpack.c.bf16 %v851, %v851
      %v916 = vpack.c.bf16 %v852, %v852
      %v917 = vpack.c.bf16 %v853, %v853
      %v918 = vpack.c.bf16 %v854, %v854
      %v919 = vpack.c.bf16 %v855, %v855
      %v920 = vpack.c.bf16 %v856, %v856
      %v921 = vpack.c.bf16 %v857, %v857
      %v922 = vpack.c.bf16 %v858, %v858
      %v923 = vpack.c.bf16 %v859, %v859
      %v924 = vpack.c.bf16 %v860, %v860
      %v925 = vpack.c.bf16 %v861, %v861
      %v926 = vpack.c.bf16 %v862, %v862
      %v927 = vpack.c.bf16 %v863, %v863
      %v928 = vpack.c.bf16 %v864, %v864
      %v929 = vpack.c.bf16 %v865, %v865
      %v930 = vpack.c.bf16 %v866, %v866
      %v931 = vpack.c.bf16 %v867, %v867
      %v932 = vpack.c.bf16 %v868, %v868
      %v933 = vpack.c.bf16 %v869, %v869
      %v934 = vpack.c.bf16 %v870, %v870
      %v935 = vpack.c.bf16 %v871, %v871
      %v936 = vpack.c.bf16 %v872, %v872
      %v937 = vpack.c.bf16 %v873, %v873
      %v938 = vpack.c.bf16 %v874, %v874
      %v939 = vpack.c.bf16 %v875, %v875
      %v940 = vpack.c.bf16 %v876, %v876
      %v941 = vpack.c.bf16 %v877, %v877
      %v942 = vpack.c.bf16 %v878, %v878
      %v943 = vpack.c.bf16 %v879, %v879
      %v944 = vpack.c.bf16 %v880, %v880
      %v945 = vpack.c.bf16 %v881, %v881
      %v946 = vpack.c.bf16 %v882, %v882
      %v947 = vpack.c.bf16 %v883, %v883
      %v948 = vpack.c.bf16 %v884, %v884
      %v949 = vpack.c.bf16 %v885, %v885
      %v950 = vpack.c.bf16 %v886, %v886
      %v951 = vpack.c.bf16 %v887, %v887
      %v952 = vpack.c.bf16 %v888, %v888
      %v953 = vpack.c.bf16 %v889, %v889
      %v954 = vpack.c.bf16 %v890, %v890
      %v955 = vpack.c.bf16 %v891, %v891
      %v956 = vpack.c.bf16 %v892, %v892
      %v957 = vpack.c.bf16 %v893, %v893
      %v958 = vpack.c.bf16 %v894, %v894
      %v959 = vpack.c.bf16 %v895, %v895
      %v960 = vpack.c.bf16 %v896, %v896
      %vm961 = vcmask 257024
      %962 = vst.msk [vmem:[%s199] sm:$0xf] %vm961, %v897
      %963 = vst.msk [vmem:[%s199 + $0x4] sm:$0xf] %vm961, %v898
      %964 = vst.msk [vmem:[%s199 + $0x8] sm:$0xf] %vm961, %v899
      %965 = vst.msk [vmem:[%s199 + $0xc] sm:$0xf] %vm961, %v900
      %966 = vst.msk [vmem:[%s199 + $0x10] sm:$0xf] %vm961, %v901
      %967 = vst.msk [vmem:[%s199 + $0x14] sm:$0xf] %vm961, %v902
      %968 = vst.msk [vmem:[%s199 + $0x18] sm:$0xf] %vm961, %v903
      %969 = vst.msk [vmem:[%s199 + $0x1c] sm:$0xf] %vm961, %v904
      %970 = vst.msk [vmem:[%s199 + $0x20] sm:$0xf] %vm961, %v905
      %971 = vst.msk [vmem:[%s199 + $0x24] sm:$0xf] %vm961, %v906
      %972 = vst.msk [vmem:[%s199 + $0x28] sm:$0xf] %vm961, %v907
      %973 = vst.msk [vmem:[%s199 + $0x2c] sm:$0xf] %vm961, %v908
      %974 = vst.msk [vmem:[%s199 + $0x30] sm:$0xf] %vm961, %v909
      %975 = vst.msk [vmem:[%s199 + $0x34] sm:$0xf] %vm961, %v910
      %976 = vst.msk [vmem:[%s199 + $0x38] sm:$0xf] %vm961, %v911
      %977 = vst.msk [vmem:[%s199 + $0x3c] sm:$0xf] %vm961, %v912
      %978 = vst.msk [vmem:[%s199 + $0x40] sm:$0xf] %vm961, %v913
      %979 = vst.msk [vmem:[%s199 + $0x44] sm:$0xf] %vm961, %v914
      %980 = vst.msk [vmem:[%s199 + $0x48] sm:$0xf] %vm961, %v915
      %981 = vst.msk [vmem:[%s199 + $0x4c] sm:$0xf] %vm961, %v916
      %982 = vst.msk [vmem:[%s199 + $0x50] sm:$0xf] %vm961, %v917
      %983 = vst.msk [vmem:[%s199 + $0x54] sm:$0xf] %vm961, %v918
      %984 = vst.msk [vmem:[%s199 + $0x58] sm:$0xf] %vm961, %v919
      %985 = vst.msk [vmem:[%s199 + $0x5c] sm:$0xf] %vm961, %v920
      %986 = vst.msk [vmem:[%s199 + $0x60] sm:$0xf] %vm961, %v921
      %987 = vst.msk [vmem:[%s199 + $0x64] sm:$0xf] %vm961, %v922
      %988 = vst.msk [vmem:[%s199 + $0x68] sm:$0xf] %vm961, %v923
      %989 = vst.msk [vmem:[%s199 + $0x6c] sm:$0xf] %vm961, %v924
      %990 = vst.msk [vmem:[%s199 + $0x70] sm:$0xf] %vm961, %v925
      %991 = vst.msk [vmem:[%s199 + $0x74] sm:$0xf] %vm961, %v926
      %992 = vst.msk [vmem:[%s199 + $0x78] sm:$0xf] %vm961, %v927
      %993 = vst.msk [vmem:[%s199 + $0x7c] sm:$0xf] %vm961, %v928
      %994 = vst.msk [vmem:[%s199 + $0x80] sm:$0xf] %vm961, %v929
      %995 = vst.msk [vmem:[%s199 + $0x84] sm:$0xf] %vm961, %v930
      %996 = vst.msk [vmem:[%s199 + $0x88] sm:$0xf] %vm961, %v931
      %997 = vst.msk [vmem:[%s199 + $0x8c] sm:$0xf] %vm961, %v932
      %998 = vst.msk [vmem:[%s199 + $0x90] sm:$0xf] %vm961, %v933
      %999 = vst.msk [vmem:[%s199 + $0x94] sm:$0xf] %vm961, %v934
      %1000 = vst.msk [vmem:[%s199 + $0x98] sm:$0xf] %vm961, %v935
      %1001 = vst.msk [vmem:[%s199 + $0x9c] sm:$0xf] %vm961, %v936
      %1002 = vst.msk [vmem:[%s199 + $0xa0] sm:$0xf] %vm961, %v937
      %1003 = vst.msk [vmem:[%s199 + $0xa4] sm:$0xf] %vm961, %v938
      %1004 = vst.msk [vmem:[%s199 + $0xa8] sm:$0xf] %vm961, %v939
      %1005 = vst.msk [vmem:[%s199 + $0xac] sm:$0xf] %vm961, %v940
      %1006 = vst.msk [vmem:[%s199 + $0xb0] sm:$0xf] %vm961, %v941
      %1007 = vst.msk [vmem:[%s199 + $0xb4] sm:$0xf] %vm961, %v942
      %1008 = vst.msk [vmem:[%s199 + $0xb8] sm:$0xf] %vm961, %v943
      %1009 = vst.msk [vmem:[%s199 + $0xbc] sm:$0xf] %vm961, %v944
      %1010 = vst.msk [vmem:[%s199 + $0xc0] sm:$0xf] %vm961, %v945
      %1011 = vst.msk [vmem:[%s199 + $0xc4] sm:$0xf] %vm961, %v946
      %1012 = vst.msk [vmem:[%s199 + $0xc8] sm:$0xf] %vm961, %v947
      %1013 = vst.msk [vmem:[%s199 + $0xcc] sm:$0xf] %vm961, %v948
      %1014 = vst.msk [vmem:[%s199 + $0xd0] sm:$0xf] %vm961, %v949
      %1015 = vst.msk [vmem:[%s199 + $0xd4] sm:$0xf] %vm961, %v950
      %1016 = vst.msk [vmem:[%s199 + $0xd8] sm:$0xf] %vm961, %v951
      %1017 = vst.msk [vmem:[%s199 + $0xdc] sm:$0xf] %vm961, %v952
      %1018 = vst.msk [vmem:[%s199 + $0xe0] sm:$0xf] %vm961, %v953
      %1019 = vst.msk [vmem:[%s199 + $0xe4] sm:$0xf] %vm961, %v954
      %1020 = vst.msk [vmem:[%s199 + $0xe8] sm:$0xf] %vm961, %v955
      %1021 = vst.msk [vmem:[%s199 + $0xec] sm:$0xf] %vm961, %v956
      %1022 = vst.msk [vmem:[%s199 + $0xf0] sm:$0xf] %vm961, %v957
      %1023 = vst.msk [vmem:[%s199 + $0xf4] sm:$0xf] %vm961, %v958
      %1024 = vst.msk [vmem:[%s199 + $0xf8] sm:$0xf] %vm961, %v959
      %1025 = vst.msk [vmem:[%s199 + $0xfc] sm:$0xf] %vm961, %v960
      %s1026 = smul.u32 64, %s15
      %p1027 = scmp.lt.s32.totalorder %s1026, 255
      %s1028 = scalar_select %p1027, %s1026, 255
      %s1029 = smul.addr %s1028, 4
      %s1030 = scalar_lea.vmem %s4, %s1029
      // Predicated region
      $region37: #{tpu_custom_call.1} parent=35 // pred_check
        %p1031 = pneg %p122
      $region38: #{tpu_custom_call.1} parent=35 // pred_check_branch
        %1033 = sbr.rel (%p1031) target = $region40
      $region39: #{tpu_custom_call.1} parent=35 // pred_region
        %s1034 = smul.u32 64, %s15
      $region40: #{tpu_custom_call.1} parent=35 // pred_fallthru
        _
    $region36: #{tpu_custom_call.1} parent=5 // pred_fallthru
      _
    %p1035 = scmp.le.s32.totalorder 2, %s10
    // Predicated region
    $region41: #{tpu_custom_call.1} parent=5 // pred_check
      %p1036 = pneg %p1035
    $region42: #{tpu_custom_call.1} parent=5 // pred_check_branch
      %1038 = sbr.rel (%p1036) target = $region44
    $region43: #{tpu_custom_call.1} parent=5 // pred_region
      %s1039 = ssub.s32 %s10, 2
      // Predicated region
      $region45: #{tpu_custom_call.1} parent=43 // pred_check
        %p1040 = pneg %p128
      $region46: #{tpu_custom_call.1} parent=43 // pred_check_branch
        %1042 = sbr.rel (%p1040) target = $region48
      $region47: #{tpu_custom_call.1} parent=43 // pred_region
        %s1043 = smul.u32 64, %s16
        %p1044 = scmp.lt.s32.totalorder %s1043, 255
        %s1045 = scalar_select %p1044, %s1043, 255
        %s1046 = smul.addr %s1045, 4
        %s1047 = scalar_lea.vmem %s4, %s1046
      $region48: #{tpu_custom_call.1} parent=43 // pred_fallthru
        _
    $region44: #{tpu_custom_call.1} parent=5 // pred_fallthru
      _
  $region6: #{tpu_custom_call.1} parent=0 // loop_footer
    %s14 = sadd.s32 1, %s10
  $region7: #{tpu_custom_call.1} parent=0 // loop_footer_branch
    %9 = sbr.rel target = $region3
  $region8: #{tpu_custom_call.1} parent=0 // loop_exit
    _

</llo_original>
